<compile_context>
chip_gen: v7x
topology: tpu7x:2x2x1
jax: 0.10.0
libtpu: 0.0.40
codegen_flags: <defaults>
</compile_context>

<pallas_src>
import math

import jax
import jax.numpy as jnp
from jax.experimental import pallas as pl
from jax.experimental.pallas import tpu as pltpu


# ~2 MiB tiles: with default double-buffering on input + output (~4x tile
# bytes of VMEM) this stays well inside the scoped-VMEM budget on v5e/v6e/v7x.
_TILE_BYTES = 2 * 1024 * 1024
_MAX_TILE_ROWS = 512
_SUBLANE = 8
_LANE = 128


def _pick_tile(dim: int, unit: int, cap: int) -> int:
    """Largest multiple of `unit` that divides `dim` and is <= cap.

    If `dim` is smaller than `unit` or not a multiple of it, the full dim is
    used (a block dim equal to the full array dim satisfies the TPU (8, 128)
    tiling rule).
    """
    if dim <= unit or dim % unit != 0:
        return dim
    k_max = min(dim // unit, max(cap // unit, 1))
    for k in range(k_max, 0, -1):
        cand = k * unit
        if dim % cand == 0:
            return cand
    return unit


def _copy_kernel(x_ref, o_ref):
    # Pure data movement: one lane/sublane-dense VMEM tile in, same tile out.
    # No in-kernel reshape -> no cross-lane/sublane relayout.
    o_ref[...] = x_ref[...]


def flatten_layer(x, keep_dim: int = 1):
    """Pallas equivalent of FlattenLayer(keep_dim).forward(x)."""
    lead_shape = x.shape[:keep_dim]
    trail_shape = x.shape[keep_dim:]
    flat = int(math.prod(trail_shape)) if trail_shape else 1
    n_lead = int(math.prod(lead_shape)) if lead_shape else 1
    out_shape = lead_shape + (flat,)

    # Metadata-only reshape in the wrapper; the kernel sees a 2D lane-dense
    # slab and does a straight vld/vst copy.
    x2d = x.reshape((n_lead, flat))
    itemsize = jnp.dtype(x.dtype).itemsize

    # Row tile: multiple of 8 sublanes (or the full dim).  Column tile:
    # multiple of 128 lanes (or the full dim), sized to ~_TILE_BYTES.
    tm = _pick_tile(n_lead, _SUBLANE, _MAX_TILE_ROWS)
    col_cap = max(_LANE, _TILE_BYTES // max(tm * itemsize, 1))
    tn = _pick_tile(flat, _LANE, col_cap)

    # Keep at least two grid steps when the whole array fits in one tile so
    # the "parallel" axes can be sharded across both TensorCores on v7x.
    if n_lead == tm and flat == tn:
        if tn % (2 * _LANE) == 0:
            tn //= 2
        elif tm % (2 * _SUBLANE) == 0:
            tm //= 2

    grid = (n_lead // tm, flat // tn)

    out2d = pl.pallas_call(
        _copy_kernel,
        out_shape=jax.ShapeDtypeStruct((n_lead, flat), x.dtype),
        grid=grid,
        in_specs=[pl.BlockSpec((tm, tn), lambda i, j: (i, j))],
        out_specs=pl.BlockSpec((tm, tn), lambda i, j: (i, j)),
        compiler_params=pltpu.CompilerParams(
            dimension_semantics=("parallel", "parallel"),
            vmem_limit_bytes=32 * 1024 * 1024,
        ),
    )(x2d)

    return out2d.reshape(out_shape)


if __name__ == "__main__":
    key = jax.random.PRNGKey(0)
    # Small NCHW input consistent with the module: batch=2, channels=4, 16x16.
    x = jax.random.normal(key, (2, 4, 16, 16), dtype=jnp.float32)

    y = flatten_layer(x, keep_dim=1)
    y = jax.block_until_ready(y)

    # Reference: plain reshape (exact semantics of the PyTorch module).
    y_ref = x.reshape(x.shape[0], -1)
    assert y.shape == y_ref.shape, (y.shape, y_ref.shape)
    assert y.dtype == y_ref.dtype
    assert bool(jnp.array_equal(y, y_ref))

    print("KERNEL_OK")
</pallas_src>

<mosaic_0001>
module attributes {stable_mosaic.version = 11 : i64} {
  func.func @_copy_kernel(%arg0: i32, %arg1: i32, %arg2: memref<2x512xf32, #tpu.memory_space<vmem>>, %arg3: memref<2x512xf32, #tpu.memory_space<vmem>>) attributes {dimension_semantics = [#tpu.dimension_semantics<parallel>, #tpu.dimension_semantics<parallel>], iteration_bounds = array<i64: 1, 2>, scalar_prefetch = 0 : i64, scratch_operands = 0 : i64, tpu.core_type = #tpu.core_type<tc>, window_params = [{transform_indices = @transform_0, window_bounds = array<i64: 2, 512>}, {transform_indices = @transform_1, window_bounds = array<i64: 2, 512>}]} {
    %c0 = arith.constant 0 : index
    %c0_0 = arith.constant 0 : index
    %0 = vector.load %arg2[%c0, %c0_0] : memref<2x512xf32, #tpu.memory_space<vmem>>, vector<2x512xf32>
    %c0_1 = arith.constant 0 : index
    %c0_2 = arith.constant 0 : index
    %1 = vector.load %arg3[%c0_1, %c0_2] : memref<2x512xf32, #tpu.memory_space<vmem>>, vector<2x512xf32>
    tpu.vector_store %arg3[%c0_1, %c0_2], %0 {strides = array<i32>} : memref<2x512xf32, #tpu.memory_space<vmem>>, vector<2x512xf32>,
    return
  }
  func.func @transform_0(%arg0: i32, %arg1: i32) -> (i32, i32) {
    %c0_i32 = arith.constant 0 : i32
    return %arg0, %arg1 : i32, i32
  }
  func.func @transform_1(%arg0: i32, %arg1: i32) -> (i32, i32) {
    %c0_i32 = arith.constant 0 : i32
    return %arg0, %arg1 : i32, i32
  }
}

</mosaic_0001>

<llo_original>
// kernel: tpu_custom_call.1
$region0: #{tpu_custom_call.1}
  #allocation0 [shape = 'u32[]', space=smem, size = 0x4, offset = 0x4, fixed_abs, tag = 'smem constant byte address 0x4 - core index']
  #allocation1 [shape = 'u32[144,128]{1,0:T(1,128)}', space=vmem, size = 0x12000, scoped, tag = 'internal scratch']
  %s0 = inlined_call_operand.hbm [shape: f32[2,1024], index: 0, kind: input, shape index: {}]
  %s1 = inlined_call_operand.hbm [shape: f32[2,1024], index: 1, kind: output, shape index: {}]
  %s2 = sld [smem:[#allocation0]]
  $region41: #{tpu_custom_call.1} parent=0
    _
  %s4 = ssub.s32 1, %s2
  %s5 = scalar_select 0, %s4, %s2
  $region1: #{tpu_custom_call.1} parent=0
    #allocation2 [shape = 'u8[8192]{0}', space=vmem, size = 0x2000, scoped, tag = 'input window, operand 0']
    #allocation3 [shape = 's32[2]{0}', space=sflag, size = 0x8, scoped, tag = 'scoped memory for tpu_custom_call.1']
    #allocation4 [shape = 's32[2]{0}', space=sflag, size = 0x8, scoped, tag = 'scoped memory for tpu_custom_call.1']
    #allocation5 [shape = 'u8[8192]{0}', space=vmem, size = 0x2000, scoped, tag = 'output window, operand 0']
    %6 = vsyncpa [#allocation3], 0
    %s7 = scalar_lea.sflag [#allocation3], 1
    %8 = vsyncpa %s7, 0
    %9 = vsyncpa [#allocation4], 0
    %s10 = scalar_lea.sflag [#allocation4], 1
    %11 = vsyncpa %s10, 0
    loop: start=0, step=1, limit=4
    $region2: #{tpu_custom_call.1} parent=1 // loop_pre_header
      _
    $region3: #{tpu_custom_call.1} parent=1 // loop_header
      %s13 = sphi 0, %s17
      %p14 = scmp.ge.s32.totalorder %s13, 4
      %s20 = sphi 0, %s32
      %s21 = sphi 0, %s28
      %s22 = sphi 0, %s20
      %s23 = sphi 0, %s21
      %s24 = sphi 0, %s22
      %s25 = sphi 0, %s23
      %s37 = sphi 0, %s39
      %s40 = sphi 0, %s37
      %s41 = sphi 0, %s40
      %s57 = sphi 0, %s41
      %s65 = sphi 0, %s67
      %s68 = sphi 0, %s65
      %s69 = sphi 0, %s68
      %s85 = sphi 0, %s69
    $region4: #{tpu_custom_call.1} parent=1 // loop_header_branch
      %16 = sbr.rel (%p14) target = $region8
    $region5: #{tpu_custom_call.1} parent=1 // loop_body
      %s18 = ssub.s32 %s13, 1
      %s19 = ssub.s32 %s13, 2
      %s26 = sadd.s32 1, %s21
      %p27 = scmp.ge.s32.totalorder %s26, 2
      %s28 = scalar_select %p27, 0, %s26
      %s29 = sadd.s32 1, %s20
      %s30 = scalar_select %p27, %s29, %s20
      %p31 = scmp.ge.s32.totalorder %s30, 1
      %s32 = scalar_select %p31, 0, %s30
      %s33 = ssub.s32 %s20, %s32
      %s34 = ssub.s32 %s21, %s28
      %s35 = sor.u32 %s33, %s34
      %p36 = scmp.eq.s32.totalorder %s35, 0
      %s38 = sadd.s32 %s37, 1
      %s39 = scalar_select %p36, %s37, %s38
      %p42 = pneg %p36
      %p43 = scmp.eq.s32.totalorder %s13, 1
      %p44 = por %p42, %p43
      %p45 = scmp.ne.s32.totalorder %s37, %s40
      %p46 = scmp.eq.s32.totalorder %s13, 0
      %p47 = por %p45, %p46
      %p48 = scmp.ne.s32.totalorder %s37, %s40
      %p49 = scmp.eq.s32.totalorder %s18, 1
      %p50 = por %p48, %p49
      %p51 = scmp.ne.s32.totalorder %s40, %s41
      %p52 = scmp.eq.s32.totalorder %s18, 0
      %p53 = por %p51, %p52
      %p54 = scmp.ne.s32.totalorder %s40, %s41
      %p55 = scmp.eq.s32.totalorder %s19, 1
      %p56 = por %p54, %p55
      %p58 = scmp.ne.s32.totalorder %s41, %s57
      %p59 = scmp.eq.s32.totalorder %s19, 0
      %p60 = por %p58, %p59
      %s61 = ssub.s32 %s20, %s32
      %s62 = ssub.s32 %s21, %s28
      %s63 = sor.u32 %s61, %s62
      %p64 = scmp.eq.s32.totalorder %s63, 0
      %s66 = sadd.s32 %s65, 1
      %s67 = scalar_select %p64, %s65, %s66
      %p70 = pneg %p64
      %p71 = scmp.eq.s32.totalorder %s13, 1
      %p72 = por %p70, %p71
      %p73 = scmp.ne.s32.totalorder %s65, %s68
      %p74 = scmp.eq.s32.totalorder %s13, 0
      %p75 = por %p73, %p74
      %p76 = scmp.ne.s32.totalorder %s65, %s68
      %p77 = scmp.eq.s32.totalorder %s18, 1
      %p78 = por %p76, %p77
      %p79 = scmp.ne.s32.totalorder %s68, %s69
      %p80 = scmp.eq.s32.totalorder %s18, 0
      %p81 = por %p79, %p80
      %p82 = scmp.ne.s32.totalorder %s68, %s69
      %p83 = scmp.eq.s32.totalorder %s19, 1
      %p84 = por %p82, %p83
      %p86 = scmp.ne.s32.totalorder %s69, %s85
      %p87 = scmp.eq.s32.totalorder %s19, 0
      %p88 = por %p86, %p87
      %p89 = scmp.le.s32.totalorder 1, %s13
      %p90 = scmp.lt.s32.totalorder %s13, 3
      %p91 = pnand %p89, %p90
      %p92 = pneg %p91
      // Predicated region
      $region9: #{tpu_custom_call.1} parent=5 // pred_check
        _
      $region10: #{tpu_custom_call.1} parent=5 // pred_check_branch
        %94 = sbr.rel (%p91) target = $region12
      $region11: #{tpu_custom_call.1} parent=5 // pred_region
        %s95 = ssub.s32 %s13, 1
      $region12: #{tpu_custom_call.1} parent=5 // pred_fallthru
        _
      %p96 = scmp.lt.s32.totalorder %s13, 2
      // Predicated region
      $region13: #{tpu_custom_call.1} parent=5 // pred_check
        %p97 = pneg %p96
      $region14: #{tpu_custom_call.1} parent=5 // pred_check_branch
        %99 = sbr.rel (%p97) target = $region16
      $region15: #{tpu_custom_call.1} parent=5 // pred_region
        // Predicated region
        $region17: #{tpu_custom_call.1} parent=15 // pred_check
          %p100 = pneg %p47
        $region18: #{tpu_custom_call.1} parent=15 // pred_check_branch
          %102 = sbr.rel (%p100) target = $region20
        $region19: #{tpu_custom_call.1} parent=15 // pred_region
          %s103 = sand.u32 %s37, 1
          %s104 = scalar_lea.sflag [#allocation3], %s103
          %s105 = sand.u32 %s37, 1
          %s106 = smul.addr %s105, 8
          %s107 = scalar_lea.vmem [#allocation2], %s106
          %s108 = smul.u32 4, %s21
          %s110 = ssub.s32 128, 128
          %111 = vsyncadd %s104, %s110
          %s112 = smul.addr %s20, 8
          %s113 = sadd.s32 %s108, %s112
          %s114 = smul.addr %s113, 32
          %s115 = scalar_lea.hbm %s0, %s114
          %s117 = sshll.u32 %s107, 4
          %s118 = int_to_ptr.vmem [resolvable:$true] %s117
          %120 = dma.hbm_to_vmem [thread:$0]  %s115, 128, %s118, %s104
        $region20: #{tpu_custom_call.1} parent=15 // pred_fallthru
          _
      $region16: #{tpu_custom_call.1} parent=5 // pred_fallthru
        _
      %p121 = scmp.le.s32.totalorder 1, %s13
      %p122 = scmp.lt.s32.totalorder %s13, 3
      %p123 = pnand %p121, %p122
      %p124 = pneg %p123
      // Predicated region
      $region21: #{tpu_custom_call.1} parent=5 // pred_check
        _
      $region22: #{tpu_custom_call.1} parent=5 // pred_check_branch
        %126 = sbr.rel (%p123) target = $region24
      $region23: #{tpu_custom_call.1} parent=5 // pred_region
        %s127 = ssub.s32 %s13, 1
        %s128 = sand.u32 %s40, 1
        %s129 = scalar_lea.sflag [#allocation3], %s128
        %s130 = sand.u32 %s40, 1
        %s131 = smul.addr %s130, 8
        %s132 = scalar_lea.vmem [#allocation2], %s131
        // Predicated region
        $region25: #{tpu_custom_call.1} parent=23 // pred_check
          %p133 = pneg %p53
        $region26: #{tpu_custom_call.1} parent=23 // pred_check_branch
          %135 = sbr.rel (%p133) target = $region28
        $region27: #{tpu_custom_call.1} parent=23 // pred_region
          %136 = dma.done %s129, 128
        $region28: #{tpu_custom_call.1} parent=23 // pred_fallthru
          _
        %s137 = sand.u32 %s40, 1
        %s138 = scalar_lea.sflag [#allocation3], %s137
        %s139 = sand.u32 %s40, 1
        %s140 = smul.addr %s139, 8
        %s141 = scalar_lea.vmem [#allocation2], %s140
        %p142 = pneg %p53
        %p143 = pneg %p50
        %p144 = pneg %p81
        %p145 = pneg %p78
        %s146 = sand.u32 %s68, 1
        %s147 = scalar_lea.sflag [#allocation4], %s146
        %s148 = sand.u32 %s68, 1
        %s149 = smul.addr %s148, 8
        %s150 = scalar_lea.vmem [#allocation5], %s149
        %s151 = smul.u32 4, %s23
        %s152 = smul.u32 4, %s23
        %v153 = vld [vmem:[%s132] sm:$0xff]
        %154 = vst [vmem:[%s150] sm:$0xff] %v153
        %s155 = sand.u32 %s68, 1
        %s156 = scalar_lea.sflag [#allocation4], %s155
        %s157 = sand.u32 %s68, 1
        %s158 = smul.addr %s157, 8
        %s159 = scalar_lea.vmem [#allocation5], %s158
        // Predicated region
        $region29: #{tpu_custom_call.1} parent=23 // pred_check
          %p160 = pneg %p78
        $region30: #{tpu_custom_call.1} parent=23 // pred_check_branch
          %162 = sbr.rel (%p160) target = $region32
        $region31: #{tpu_custom_call.1} parent=23 // pred_region
          %s163 = smul.u32 4, %s23
          %s165 = ssub.s32 128, 128
          %166 = vsyncadd %s156, %s165
          %s167 = smul.addr %s22, 8
          %s168 = sadd.s32 %s163, %s167
          %s169 = smul.addr %s168, 32
          %s170 = scalar_lea.hbm %s1, %s169
          %s172 = sshll.u32 %s159, 4
          %s173 = int_to_ptr.vmem [resolvable:$true] %s172
          %175 = dma.vmem_to_hbm [thread:$0]  %s173, 128, %s170, %s156
        $region32: #{tpu_custom_call.1} parent=23 // pred_fallthru
          _
      $region24: #{tpu_custom_call.1} parent=5 // pred_fallthru
        _
      %p176 = scmp.le.s32.totalorder 2, %s13
      // Predicated region
      $region33: #{tpu_custom_call.1} parent=5 // pred_check
        %p177 = pneg %p176
      $region34: #{tpu_custom_call.1} parent=5 // pred_check_branch
        %179 = sbr.rel (%p177) target = $region36
      $region35: #{tpu_custom_call.1} parent=5 // pred_region
        %s180 = ssub.s32 %s13, 2
        // Predicated region
        $region37: #{tpu_custom_call.1} parent=35 // pred_check
          %p181 = pneg %p84
        $region38: #{tpu_custom_call.1} parent=35 // pred_check_branch
          %183 = sbr.rel (%p181) target = $region40
        $region39: #{tpu_custom_call.1} parent=35 // pred_region
          %s184 = sand.u32 %s69, 1
          %s185 = scalar_lea.sflag [#allocation4], %s184
          %s186 = sand.u32 %s69, 1
          %s187 = smul.addr %s186, 8
          %s188 = scalar_lea.vmem [#allocation5], %s187
          %189 = dma.done %s185, 128
        $region40: #{tpu_custom_call.1} parent=35 // pred_fallthru
          _
      $region36: #{tpu_custom_call.1} parent=5 // pred_fallthru
        _
    $region6: #{tpu_custom_call.1} parent=1 // loop_footer
      %s17 = sadd.s32 1, %s13
    $region7: #{tpu_custom_call.1} parent=1 // loop_footer_branch
      %12 = sbr.rel target = $region3
    $region8: #{tpu_custom_call.1} parent=1 // loop_exit
      _
    %190 = vsyncpa [#allocation3], 1
    %s191 = scalar_lea.sflag [#allocation3], 1
    %192 = vsyncpa %s191, 1
    %193 = vsyncpa [#allocation4], 1
    %s194 = scalar_lea.sflag [#allocation4], 1
    %195 = vsyncpa %s194, 1

</llo_original>
